<compile_context>
chip_gen: v7x
topology: tpu7x:2x2x1
jax: 0.10.0
libtpu: 0.0.40
codegen_flags: <defaults>
</compile_context>

<pallas_src>
import math

import jax
import jax.numpy as jnp
from jax.experimental import pallas as pl
from jax.experimental.pallas import tpu as pltpu

# Lane-dense last-dim widths to try (all multiples of 128), widest first.
_LANE_CHOICES = (8192, 4096, 2048, 1024, 512, 256, 128)
_TARGET_BLOCK_BYTES = 4 * 1024 * 1024     # ~4 MiB per block
_VMEM_LIMIT_BYTES = 32 * 1024 * 1024      # safe on v5e/v6e/v7x (phys 128/128/64 MiB)


def toy_kernel(params_ref, x_ref, o_ref):
    # params_ref (SMEM, f32[4]) = [w1, b1, w2, b2]; grid-invariant scalars.
    w1 = params_ref[0]
    b1 = params_ref[1]
    w2 = params_ref[2]
    b2 = params_ref[3]
    x = x_ref[...].astype(jnp.float32)               # upcast in-register (v5e-safe)
    h = jnp.maximum(x * w1 + b1, 0.0)                # conv1 (1x1, 1->1) + ReLU
    o_ref[...] = (h * w2 + b2).astype(o_ref.dtype)   # conv2 (1x1, 1->1)


def _fused_ref(x, w1, b1, w2, b2):
    # Same fused math in plain jnp (used only for the tiny ragged tail).
    y = jnp.maximum(x.astype(jnp.float32) * w1 + b1, 0.0) * w2 + b2
    return y.astype(x.dtype)


def _run_bulk(x2d, params, *, rows, lane):
    itemsize = jnp.dtype(x2d.dtype).itemsize
    # Sublane granularity for this dtype (8 for f32, 16 for bf16, ...).
    sub = 8 * max(1, 4 // itemsize)
    # Block row count: ~_TARGET_BLOCK_BYTES, rounded to the sublane tile.
    tr = max(sub, (_TARGET_BLOCK_BYTES // (lane * itemsize)) // sub * sub)
    if rows >= 2 * sub:
        # Keep at least 2 blocks so both v7x TensorCores get HBM streams.
        tr = min(tr, max(sub, (rows // 2) // sub * sub))
    if rows < tr:
        tr = rows  # single block == full array dims (exempt from (8,128) rule)
    grid = (pl.cdiv(rows, tr),)  # Pallas masks the partial boundary block

    total = rows * lane
    cost = pl.CostEstimate(flops=4 * total, transcendentals=0,
                           bytes_accessed=2 * total * itemsize)

    return pl.pallas_call(
        toy_kernel,
        out_shape=jax.ShapeDtypeStruct((rows, lane), x2d.dtype),
        grid=grid,
        in_specs=[
            pl.BlockSpec(memory_space=pltpu.MemorySpace.SMEM),  # 4 scalars
            pl.BlockSpec((tr, lane), lambda i: (i, 0)),         # x tile
        ],
        out_specs=pl.BlockSpec((tr, lane), lambda i: (i, 0)),
        compiler_params=pltpu.CompilerParams(
            dimension_semantics=(pltpu.PARALLEL,),   # megacore sharding on v7x
            vmem_limit_bytes=_VMEM_LIMIT_BYTES),
        cost_estimate=cost,
    )(params, x2d)


def toy_model_forward(x, w1, b1, w2, b2):
    """x: [N, 1, H, W] (NCHW), any float dtype. Returns same shape and dtype."""
    orig_shape = x.shape
    assert orig_shape[1] == 1, "ToyModel uses single-channel 1x1 convs"
    total = math.prod(orig_shape)

    params = jnp.stack(
        [w1.reshape(()), b1.reshape(()), w2.reshape(()), b2.reshape(())]
    ).astype(jnp.float32)

    xf = x.reshape(-1)

    # Widest lane-dense width dividing total -> no tail at all (common case,
    # reshape is free: no pad, no slice-back, no extra HBM passes).
    lane = next((l for l in _LANE_CHOICES if total >= l and total % l == 0), None)
    if lane is not None:
        bulk = total
    else:
        # Ragged: kernel on the 128-divisible bulk, pure-JAX on the <128 tail.
        bulk = (total // 128) * 128
        lane = next((l for l in _LANE_CHOICES if bulk >= l and bulk % l == 0), 128) if bulk else 0

    pieces = []
    if bulk:
        rows = bulk // lane
        out2d = _run_bulk(xf[:bulk].reshape(rows, lane), params,
                          rows=rows, lane=lane)
        pieces.append(out2d.reshape(-1))
    if bulk < total:
        pieces.append(_fused_ref(xf[bulk:], params[0], params[1],
                                 params[2], params[3]))

    out = pieces[0] if len(pieces) == 1 else jnp.concatenate(pieces)
    return out.reshape(orig_shape)


if __name__ == "__main__":
    key = jax.random.PRNGKey(0)
    kx, k1, k2, k3, k4 = jax.random.split(key, 5)

    # Conv2d(1,1,1) parameters: weight [1,1,1,1] and bias [1] -> scalars.
    w1 = jax.random.uniform(k1, (1, 1, 1, 1), jnp.float32, -1.0, 1.0)
    b1 = jax.random.uniform(k2, (1,), jnp.float32, -1.0, 1.0)
    w2 = jax.random.uniform(k3, (1, 1, 1, 1), jnp.float32, -1.0, 1.0)
    b2 = jax.random.uniform(k4, (1,), jnp.float32, -1.0, 1.0)

    def ref(x):
        y = (jnp.maximum(w1.reshape(()) * x.astype(jnp.float32) + b1.reshape(()), 0.0)
             * w2.reshape(()) + b2.reshape(()))
        return y.astype(x.dtype)

    # 1) Small NCHW f32 input (lane-divisible fast path, in_channels=1).
    x = jax.random.normal(kx, (2, 1, 16, 16), jnp.float32)
    y = jax.block_until_ready(toy_model_forward(x, w1, b1, w2, b2))
    assert y.shape == x.shape and y.dtype == x.dtype
    assert jnp.allclose(y, ref(x), atol=1e-5, rtol=1e-5), "f32 mismatch"

    # 2) Ragged spatial size -> kernel-on-bulk + jnp-tail path.
    xr = jax.random.normal(kx, (1, 1, 13, 17), jnp.float32)
    yr = jax.block_until_ready(toy_model_forward(xr, w1, b1, w2, b2))
    assert yr.shape == xr.shape and yr.dtype == xr.dtype
    assert jnp.allclose(yr, ref(xr), atol=1e-5, rtol=1e-5), "ragged mismatch"

    # 3) bf16 input: dtype-preserving streaming (half the HBM bytes).
    xb = jax.random.normal(kx, (2, 1, 16, 16), jnp.float32).astype(jnp.bfloat16)
    yb = jax.block_until_ready(toy_model_forward(xb, w1, b1, w2, b2))
    assert yb.shape == xb.shape and yb.dtype == jnp.bfloat16
    assert jnp.allclose(yb.astype(jnp.float32), ref(xb).astype(jnp.float32),
                        atol=2e-2, rtol=2e-2), "bf16 mismatch"

    print("KERNEL_OK")
</pallas_src>

<mosaic_0001>
module attributes {stable_mosaic.version = 11 : i64} {
  func.func @toy_kernel(%arg0: i32, %arg1: memref<4xf32, #tpu.memory_space<smem>>, %arg2: memref<1x512xf32, #tpu.memory_space<vmem>>, %arg3: memref<1x512xf32, #tpu.memory_space<vmem>>) attributes {dimension_semantics = [#tpu.dimension_semantics<parallel>], iteration_bounds = array<i64: 1>, scalar_prefetch = 0 : i64, scratch_operands = 0 : i64, tpu.core_type = #tpu.core_type<tc>, window_params = [{transform_indices = @transform_0, window_bounds = array<i64: 4>}, {transform_indices = @transform_1, window_bounds = array<i64: 1, 512>}, {transform_indices = @transform_2, window_bounds = array<i64: 1, 512>}]} {
    %c0 = arith.constant 0 : index
    %0 = memref.load %arg1[%c0] : memref<4xf32, #tpu.memory_space<smem>>
    %c1 = arith.constant 1 : index
    %1 = memref.load %arg1[%c1] : memref<4xf32, #tpu.memory_space<smem>>
    %c2 = arith.constant 2 : index
    %2 = memref.load %arg1[%c2] : memref<4xf32, #tpu.memory_space<smem>>
    %c3 = arith.constant 3 : index
    %3 = memref.load %arg1[%c3] : memref<4xf32, #tpu.memory_space<smem>>
    %c0_0 = arith.constant 0 : index
    %c0_1 = arith.constant 0 : index
    %4 = vector.load %arg2[%c0_0, %c0_1] : memref<1x512xf32, #tpu.memory_space<vmem>>, vector<1x512xf32>
    %5 = vector.broadcast %0 : f32 to vector<1x512xf32>
    %6 = arith.mulf %4, %5 : vector<1x512xf32>
    %7 = vector.broadcast %1 : f32 to vector<1x512xf32>
    %8 = arith.addf %6, %7 : vector<1x512xf32>
    %cst = arith.constant 0.000000e+00 : f32
    %9 = vector.broadcast %cst : f32 to vector<1x512xf32>
    %10 = arith.maximumf %8, %9 : vector<1x512xf32>
    %11 = vector.broadcast %2 : f32 to vector<1x512xf32>
    %12 = arith.mulf %10, %11 : vector<1x512xf32>
    %13 = vector.broadcast %3 : f32 to vector<1x512xf32>
    %14 = arith.addf %12, %13 : vector<1x512xf32>
    %c0_2 = arith.constant 0 : index
    %c0_3 = arith.constant 0 : index
    %15 = vector.load %arg3[%c0_2, %c0_3] : memref<1x512xf32, #tpu.memory_space<vmem>>, vector<1x512xf32>
    tpu.vector_store %arg3[%c0_2, %c0_3], %14 {strides = array<i32>} : memref<1x512xf32, #tpu.memory_space<vmem>>, vector<1x512xf32>,
    return
  }
  func.func @transform_0(%arg0: i32) -> i32 {
    %c0_i32 = arith.constant 0 : i32
    %c0_i32_0 = arith.constant 0 : i32
    return %c0_i32 : i32
  }
  func.func @transform_1(%arg0: i32) -> (i32, i32) {
    %c0_i32 = arith.constant 0 : i32
    %c0_i32_0 = arith.constant 0 : i32
    return %arg0, %c0_i32 : i32, i32
  }
  func.func @transform_2(%arg0: i32) -> (i32, i32) {
    %c0_i32 = arith.constant 0 : i32
    %c0_i32_0 = arith.constant 0 : i32
    return %arg0, %c0_i32 : i32, i32
  }
}

</mosaic_0001>

<llo_original>
// kernel: tpu_custom_call.1
$region0: #{tpu_custom_call.1}
  #allocation0 [shape = 'u32[]', space=smem, size = 0x4, offset = 0x4, fixed_abs, tag = 'smem constant byte address 0x4 - core index']
  #allocation1 [shape = 'u32[144,128]{1,0:T(1,128)}', space=vmem, size = 0x12000, scoped, tag = 'internal scratch']
  %s0 = inlined_call_operand.hbm [shape: f32[4], index: 0, kind: input, shape index: {}]
  %s1 = inlined_call_operand.hbm [shape: f32[1,512], index: 1, kind: input, shape index: {}]
  %s2 = inlined_call_operand.hbm [shape: f32[1,512], index: 2, kind: output, shape index: {}]
  %s3 = sld [smem:[#allocation0]]
  $region26: #{tpu_custom_call.1} parent=0
    _
  %s5 = ssub.s32 1, %s3
  %s6 = scalar_select 0, %s5, %s3
  $region1: #{tpu_custom_call.1} parent=0
    #allocation2 [shape = 'u8[512]{0}', space=smem, size = 0x200, scoped, tag = 'input window, operand 0, single buffered']
    #allocation3 [shape = 's32[1]{0}', space=sflag, size = 0x4, scoped, tag = 'scoped memory for tpu_custom_call.1']
    #allocation4 [shape = 's32[1]{0}', space=sflag, size = 0x4, scoped, tag = 'scoped memory for tpu_custom_call.1']
    #allocation5 [shape = 's32[1]{0}', space=sflag, size = 0x4, scoped, tag = 'scoped memory for tpu_custom_call.1']
    #allocation6 [shape = 'u8[2048]{0}', space=vmem, size = 0x800, scoped, tag = 'input window, operand 1, single buffered']
    #allocation7 [shape = 'u8[2048]{0}', space=vmem, size = 0x800, scoped, tag = 'output window, operand 0, single buffered']
    %7 = vsyncpa [#allocation5], 0
    %8 = vsyncpa [#allocation3], 0
    %9 = vsyncpa [#allocation4], 0
    // Predicated region
    $region2: #{tpu_custom_call.1} parent=1 // pred_check
      _
    $region3: #{tpu_custom_call.1} parent=1 // pred_check_branch
      %11 = sbr.rel (0) target = $region5
    $region4: #{tpu_custom_call.1} parent=1 // pred_region
      %s13 = ssub.s32 16, 16
      %14 = vsyncadd [#allocation5], %s13
      %17 = dma.hbm_to_smem %s0, 16, [#allocation2], [#allocation5]
    $region5: #{tpu_custom_call.1} parent=1 // pred_fallthru
      _
    // Predicated region
    $region6: #{tpu_custom_call.1} parent=1 // pred_check
      _
    $region7: #{tpu_custom_call.1} parent=1 // pred_check_branch
      %19 = sbr.rel (0) target = $region9
    $region8: #{tpu_custom_call.1} parent=1 // pred_region
      %s21 = ssub.s32 64, 64
      %22 = vsyncadd [#allocation3], %s21
      %s24 = sshll.u32 [#allocation6], 4
      %s25 = int_to_ptr.vmem [resolvable:$true] %s24
      %27 = dma.hbm_to_vmem [thread:$0]  %s1, 64, %s25, [#allocation3]
    $region9: #{tpu_custom_call.1} parent=1 // pred_fallthru
      _
    // Predicated region
    $region10: #{tpu_custom_call.1} parent=1 // pred_check
      _
    $region11: #{tpu_custom_call.1} parent=1 // pred_check_branch
      %29 = sbr.rel (0) target = $region13
    $region12: #{tpu_custom_call.1} parent=1 // pred_region
      %30 = dma.done [#allocation5], 16
    $region13: #{tpu_custom_call.1} parent=1 // pred_fallthru
      _
    // Predicated region
    $region14: #{tpu_custom_call.1} parent=1 // pred_check
      _
    $region15: #{tpu_custom_call.1} parent=1 // pred_check_branch
      %32 = sbr.rel (0) target = $region17
    $region16: #{tpu_custom_call.1} parent=1 // pred_region
      %33 = dma.done [#allocation3], 64
    $region17: #{tpu_custom_call.1} parent=1 // pred_fallthru
      _
    %34 = sfence
    %s35 = sld [smem:[#allocation2]]
    %s36 = sld [smem:[#allocation2 + $0x1]]
    %s37 = sld [smem:[#allocation2 + $0x2]]
    %s38 = sld [smem:[#allocation2 + $0x3]]
    %v39 = vld [vmem:[#allocation6] sm:$0xf]
    %v40 = vstv %s35
    %v41 = vmul.f32 %v39, %v40
    %v42 = vstv %s36
    %v43 = vadd.f32 %v41, %v42
    %v44 = vmax.f32 %v43, 0.0
    %v45 = vstv %s37
    %v46 = vmul.f32 %v44, %v45
    %v47 = vstv %s38
    %v48 = vadd.f32 %v46, %v47
    %v49 = vlaneseq
    %vm50 = vcmp.ge.s32.totalorder %v49, 0
    %vm51 = vcmp.lt.s32.totalorder %v49, 512
    %vm52 = vmand %vm50, %vm51
    %53 = vst.msk [vmem:[#allocation7] sm:$0xf] %vm52, %v48
    // Predicated region
    $region18: #{tpu_custom_call.1} parent=1 // pred_check
      _
    $region19: #{tpu_custom_call.1} parent=1 // pred_check_branch
      %55 = sbr.rel (0) target = $region21
    $region20: #{tpu_custom_call.1} parent=1 // pred_region
      %s57 = ssub.s32 64, 64
      %58 = vsyncadd [#allocation4], %s57
      %s60 = sshll.u32 [#allocation7], 4
      %s61 = int_to_ptr.vmem [resolvable:$true] %s60
      %63 = dma.vmem_to_hbm [thread:$0]  %s61, 64, %s2, [#allocation4]
    $region21: #{tpu_custom_call.1} parent=1 // pred_fallthru
      _
    // Predicated region
    $region22: #{tpu_custom_call.1} parent=1 // pred_check
      _
    $region23: #{tpu_custom_call.1} parent=1 // pred_check_branch
      %65 = sbr.rel (0) target = $region25
    $region24: #{tpu_custom_call.1} parent=1 // pred_region
      %66 = dma.done [#allocation4], 64
    $region25: #{tpu_custom_call.1} parent=1 // pred_fallthru
      _
    %67 = vsyncpa [#allocation3], 1
    %68 = vsyncpa [#allocation4], 1
    %69 = vsyncpa [#allocation5], 1

</llo_original>
